<compile_context>
chip_gen: v7x
topology: tpu7x:2x2x1
jax: 0.10.0
libtpu: 0.0.40
codegen_flags: <defaults>
</compile_context>

<pallas_src>
import numpy as np
import jax
import jax.numpy as jnp
from jax.experimental import pallas as pl
from jax.experimental.pallas import tpu as pltpu


def _rup(x, m):
    return ((x + m - 1) // m) * m


def policy_kernel(x_ref, w1_ref, b1_ref, w2_ref, b2_ref, w3_ref, b3_ref,
                  g_ref, out_ref):
    """3 fused matmuls + ReLU + one vectorized grouped softmax (lane-dense)."""
    cdt = w1_ref.dtype                                           # MXU input dtype
    x = x_ref[...].astype(cdt)                                   # [TB, S]
    h1 = jnp.dot(x, w1_ref[...], preferred_element_type=jnp.float32) + b1_ref[...]
    h1 = jnp.maximum(h1, 0.0)                                    # [TB, H1p]
    h2 = jnp.dot(h1.astype(cdt), w2_ref[...],
                 preferred_element_type=jnp.float32) + b2_ref[...]
    h2 = jnp.maximum(h2, 0.0)                                    # [TB, H2p]
    # Fused fc3 (both heads) in one 128-wide MXU matmul.
    z = jnp.dot(h2.astype(cdt), w3_ref[...],
                preferred_element_type=jnp.float32) + b3_ref[...]  # [TB, Np]

    # Grouped softmax over consecutive groups of I lanes, fully vectorized:
    #  - subtract the per-row max (a constant within every group, so softmax
    #    is unchanged; logits here are tiny (init_w=0.003) so no underflow).
    #  - one exp over the whole row (single EUP pass).
    #  - per-group sums broadcast back via one matmul with the block-diagonal
    #    0/1 group matrix g_ref (MXU, keeps everything lane-dense).
    m = jnp.max(z, axis=-1, keepdims=True)                       # [TB, 1]
    e = jnp.exp(z - m)                                           # [TB, Np]
    s = jnp.dot(e, g_ref[...], preferred_element_type=jnp.float32)
    out_ref[...] = (e * pl.reciprocal(s, approx=True)).astype(out_ref.dtype)


def make_policy_params(key, nb_states, nb_actions, img_size,
                       hidden1=400, hidden2=300, init_w=0.003):
    """Deterministic parameter init mirroring Policy.__init__ / init_weights."""
    ks = jax.random.split(key, 7)

    def uniform(k, shape, v):
        return jax.random.uniform(k, shape, jnp.float32, -v, v)

    # fanin_init uses size[0] (= out_features) as fanin — replicate exactly.
    w1 = uniform(ks[0], (hidden1, nb_states), 1.0 / np.sqrt(hidden1))
    b1 = uniform(ks[1], (hidden1,), 1.0 / np.sqrt(nb_states))
    w2 = uniform(ks[2], (hidden2, hidden1), 1.0 / np.sqrt(hidden2))
    b2 = uniform(ks[3], (hidden2,), 1.0 / np.sqrt(hidden1))
    w3 = uniform(ks[4], (nb_actions * 2 * img_size, hidden2), init_w)
    b3 = uniform(ks[5], (nb_actions * 2 * img_size,), 1.0 / np.sqrt(hidden2))
    logstds = jnp.full((nb_actions,), 0.1, jnp.float32)  # unused in forward
    return dict(w1=w1, b1=b1, w2=w2, b2=b2, w3=w3, b3=b3, logstds=logstds)


def prepare_policy_params(params, nb_actions, img_size,
                          compute_dtype=jnp.float32):
    """One-time transform: transpose, de-interleave + fuse fc3 heads, pad to
    hardware tiles (zero-filled so padded columns stay exactly zero)."""
    A, I = nb_actions, img_size
    N = 2 * A * I
    w1, b1 = params["w1"], params["b1"]
    w2, b2 = params["w2"], params["b2"]
    w3, b3 = params["w3"], params["b3"]
    S, H1, H2 = w1.shape[1], w1.shape[0], w2.shape[0]
    H1p, H2p, Np = _rup(H1, 128), _rup(H2, 128), _rup(N, 128)

    def pad2(a, r, c):
        return jnp.pad(a, ((0, r - a.shape[0]), (0, c - a.shape[1])))

    w1t = pad2(w1.T, S, H1p).astype(compute_dtype)                 # [S,   H1p]
    b1p = pad2(b1[None, :], 1, H1p)                                # [1,   H1p] f32
    w2t = pad2(w2.T, H1p, H2p).astype(compute_dtype)               # [H1p, H2p]
    b2p = pad2(b2[None, :], 1, H2p)                                # [1,   H2p] f32
    # fc3 flat output index o = a*(2*I) + i*2 + c -> even cols = channel 0.
    w3ab = jnp.concatenate([w3[0::2].T, w3[1::2].T], axis=1)       # [H2, N]
    b3ab = jnp.concatenate([b3[0::2], b3[1::2]])[None, :]          # [1,  N]
    w3ab = pad2(w3ab, H2p, Np).astype(compute_dtype)               # [H2p, Np]
    b3ab = pad2(b3ab, 1, Np)                                       # [1,   Np] f32

    # Block-diagonal group-sum matrix (groups of I consecutive lanes); padded
    # lanes fall into their own groups so they never produce 0/0.
    gid = np.arange(Np) // I
    G = jnp.asarray((gid[:, None] == gid[None, :]).astype(np.float32))

    arrays = (w1t, b1p, w2t, b2p, w3ab, b3ab, G)
    dims = dict(S=S, H1p=H1p, H2p=H2p, Np=Np, N=N, A=A, I=I)
    return arrays, dims


def make_policy_forward(params, nb_actions, img_size,
                        compute_dtype=jnp.float32):
    """Build a jitted forward fn with all weight prep hoisted out of the call."""
    (w1t, b1p, w2t, b2p, w3ab, b3ab, G), d = prepare_policy_params(
        params, nb_actions, img_size, compute_dtype)
    S, H1p, H2p, Np = d["S"], d["H1p"], d["H2p"], d["Np"]
    N, A, I = d["N"], d["A"], d["I"]

    @jax.jit
    def forward(x, x1, x2, x3):
        xcat = jnp.concatenate(
            [x.astype(jnp.float32), x1.astype(jnp.float32),
             x2.astype(jnp.float32), x3.astype(jnp.float32)], axis=1)
        B = xcat.shape[0]
        # Batch tile: multiple of 8 (f32 sublane); cap at 256 for large B so
        # the batch grid pipelines and shards across TensorCores.
        B8 = _rup(max(B, 1), 8)
        tile_b = 256 if B8 >= 256 else B8
        B_pad = _rup(B, tile_b)
        x_pad = jnp.pad(xcat, ((0, B_pad - B), (0, 0)))

        out_flat = pl.pallas_call(
            policy_kernel,
            out_shape=jax.ShapeDtypeStruct((B_pad, Np), jnp.float32),
            grid=(B_pad // tile_b,),
            in_specs=[
                pl.BlockSpec((tile_b, S), lambda i: (i, 0)),      # x
                pl.BlockSpec((S, H1p), lambda i: (0, 0)),         # w1
                pl.BlockSpec((1, H1p), lambda i: (0, 0)),         # b1
                pl.BlockSpec((H1p, H2p), lambda i: (0, 0)),       # w2
                pl.BlockSpec((1, H2p), lambda i: (0, 0)),         # b2
                pl.BlockSpec((H2p, Np), lambda i: (0, 0)),        # w3 (fused)
                pl.BlockSpec((1, Np), lambda i: (0, 0)),          # b3 (fused)
                pl.BlockSpec((Np, Np), lambda i: (0, 0)),         # group matrix
            ],
            out_specs=pl.BlockSpec((tile_b, Np), lambda i: (i, 0)),
            compiler_params=pltpu.CompilerParams(
                dimension_semantics=("parallel",)),
        )(x_pad, w1t, b1p, w2t, b2p, w3ab, b3ab, G)

        # Lane-dense kernel output -> [B, 2, A, I]; split channels in XLA.
        out = out_flat[:B, :N].reshape(B, 2, A, I)
        return out[:, 0], out[:, 1]

    return forward


def policy_forward_ref(params, x, x1, x2, x3, nb_actions, img_size):
    """Pure-JAX reference (mirrors the PyTorch forward exactly)."""
    xcat = jnp.concatenate([x, x1, x2, x3], axis=1).astype(jnp.float32)
    h1 = jax.nn.relu(xcat @ params["w1"].T + params["b1"])
    h2 = jax.nn.relu(h1 @ params["w2"].T + params["b2"])
    z = (h2 @ params["w3"].T + params["b3"]).reshape(
        xcat.shape[0], nb_actions, img_size, 2)
    return jax.nn.softmax(z[..., 0], axis=-1), jax.nn.softmax(z[..., 1], axis=-1)


if __name__ == "__main__":
    # Small shapes consistent with the module's forward.
    B = 2
    feat = 8                      # per-input feature width
    nb_states = 4 * feat          # = 32 after concatenation
    nb_actions = 4
    img_size = 16
    hidden1, hidden2 = 400, 300

    key = jax.random.PRNGKey(0)
    kp, kx, k1, k2, k3 = jax.random.split(key, 5)
    params = make_policy_params(kp, nb_states, nb_actions, img_size,
                                hidden1, hidden2)

    x = jax.random.normal(kx, (B, feat), jnp.float32)
    x1 = jax.random.normal(k1, (B, feat), jnp.float32)
    x2 = jax.random.normal(k2, (B, feat), jnp.float32)
    x3 = jax.random.normal(k3, (B, feat), jnp.float32)

    # f32 MXU inputs (v5e-safe; pass compute_dtype=jnp.bfloat16 on v6e/v7x).
    forward = make_policy_forward(params, nb_actions, img_size,
                                  compute_dtype=jnp.float32)
    out1, out2 = forward(x, x1, x2, x3)
    jax.block_until_ready((out1, out2))

    r1, r2 = policy_forward_ref(params, x, x1, x2, x3, nb_actions, img_size)
    # Tolerance covers the approx-reciprocal softmax normalize (~2^-12 rel).
    np.testing.assert_allclose(np.asarray(out1), np.asarray(r1), rtol=3e-3, atol=3e-5)
    np.testing.assert_allclose(np.asarray(out2), np.asarray(r2), rtol=3e-3, atol=3e-5)
    assert out1.shape == (B, nb_actions, img_size)
    assert out2.shape == (B, nb_actions, img_size)

    print("KERNEL_OK")
</pallas_src>

<mosaic_0001>
module attributes {stable_mosaic.version = 11 : i64} {
  func.func @policy_kernel(%arg0: i32, %arg1: memref<8x32xf32, #tpu.memory_space<vmem>>, %arg2: memref<32x512xf32, #tpu.memory_space<vmem>>, %arg3: memref<1x512xf32, #tpu.memory_space<vmem>>, %arg4: memref<512x384xf32, #tpu.memory_space<vmem>>, %arg5: memref<1x384xf32, #tpu.memory_space<vmem>>, %arg6: memref<384x128xf32, #tpu.memory_space<vmem>>, %arg7: memref<1x128xf32, #tpu.memory_space<vmem>>, %arg8: memref<128x128xf32, #tpu.memory_space<vmem>>, %arg9: memref<8x128xf32, #tpu.memory_space<vmem>>) attributes {dimension_semantics = [#tpu.dimension_semantics<parallel>], iteration_bounds = array<i64: 1>, scalar_prefetch = 0 : i64, scratch_operands = 0 : i64, tpu.core_type = #tpu.core_type<tc>, window_params = [{transform_indices = @transform_0, window_bounds = array<i64: 8, 32>}, {pipeline_mode = #tpu.pipeline_mode<synchronous>, transform_indices = @transform_1, window_bounds = array<i64: 32, 512>}, {pipeline_mode = #tpu.pipeline_mode<synchronous>, transform_indices = @transform_2, window_bounds = array<i64: 1, 512>}, {pipeline_mode = #tpu.pipeline_mode<synchronous>, transform_indices = @transform_3, window_bounds = array<i64: 512, 384>}, {pipeline_mode = #tpu.pipeline_mode<synchronous>, transform_indices = @transform_4, window_bounds = array<i64: 1, 384>}, {pipeline_mode = #tpu.pipeline_mode<synchronous>, transform_indices = @transform_5, window_bounds = array<i64: 384, 128>}, {pipeline_mode = #tpu.pipeline_mode<synchronous>, transform_indices = @transform_6, window_bounds = array<i64: 1, 128>}, {pipeline_mode = #tpu.pipeline_mode<synchronous>, transform_indices = @transform_7, window_bounds = array<i64: 128, 128>}, {transform_indices = @transform_8, window_bounds = array<i64: 8, 128>}]} {
    %c0 = arith.constant 0 : index
    %c0_0 = arith.constant 0 : index
    %0 = vector.load %arg1[%c0, %c0_0] : memref<8x32xf32, #tpu.memory_space<vmem>>, vector<8x32xf32>
    %c0_1 = arith.constant 0 : index
    %c0_2 = arith.constant 0 : index
    %1 = vector.load %arg2[%c0_1, %c0_2] : memref<32x512xf32, #tpu.memory_space<vmem>>, vector<32x512xf32>
    %cst = arith.constant dense<0.000000e+00> : vector<8x512xf32>
    %2 = tpu.matmul %0, %1, %cst {dimension_numbers = #tpu.dot_dimension_numbers<[1], [0], [0], [1], [0, 0, 1, 1], [], []>} : vector<8x32xf32>, vector<32x512xf32>, vector<8x512xf32> -> vector<8x512xf32>
    %c0_3 = arith.constant 0 : index
    %c0_4 = arith.constant 0 : index
    %3 = vector.load %arg3[%c0_3, %c0_4] : memref<1x512xf32, #tpu.memory_space<vmem>>, vector<1x512xf32>
    %4 = vector.broadcast %3 : vector<1x512xf32> to vector<8x512xf32>
    %5 = arith.addf %2, %4 : vector<8x512xf32>
    %cst_5 = arith.constant 0.000000e+00 : f32
    %6 = vector.broadcast %cst_5 : f32 to vector<8x512xf32>
    %7 = arith.maximumf %5, %6 : vector<8x512xf32>
    %c0_6 = arith.constant 0 : index
    %c0_7 = arith.constant 0 : index
    %8 = vector.load %arg4[%c0_6, %c0_7] : memref<512x384xf32, #tpu.memory_space<vmem>>, vector<512x384xf32>
    %cst_8 = arith.constant dense<0.000000e+00> : vector<8x384xf32>
    %9 = tpu.matmul %7, %8, %cst_8 {dimension_numbers = #tpu.dot_dimension_numbers<[1], [0], [0], [1], [0, 0, 1, 1], [], []>} : vector<8x512xf32>, vector<512x384xf32>, vector<8x384xf32> -> vector<8x384xf32>
    %c0_9 = arith.constant 0 : index
    %c0_10 = arith.constant 0 : index
    %10 = vector.load %arg5[%c0_9, %c0_10] : memref<1x384xf32, #tpu.memory_space<vmem>>, vector<1x384xf32>
    %11 = vector.broadcast %10 : vector<1x384xf32> to vector<8x384xf32>
    %12 = arith.addf %9, %11 : vector<8x384xf32>
    %cst_11 = arith.constant 0.000000e+00 : f32
    %13 = vector.broadcast %cst_11 : f32 to vector<8x384xf32>
    %14 = arith.maximumf %12, %13 : vector<8x384xf32>
    %c0_12 = arith.constant 0 : index
    %c0_13 = arith.constant 0 : index
    %15 = vector.load %arg6[%c0_12, %c0_13] : memref<384x128xf32, #tpu.memory_space<vmem>>, vector<384x128xf32>
    %cst_14 = arith.constant dense<0.000000e+00> : vector<8x128xf32>
    %16 = tpu.matmul %14, %15, %cst_14 {dimension_numbers = #tpu.dot_dimension_numbers<[1], [0], [0], [1], [0, 0, 1, 1], [], []>} : vector<8x384xf32>, vector<384x128xf32>, vector<8x128xf32> -> vector<8x128xf32>
    %c0_15 = arith.constant 0 : index
    %c0_16 = arith.constant 0 : index
    %17 = vector.load %arg7[%c0_15, %c0_16] : memref<1x128xf32, #tpu.memory_space<vmem>>, vector<1x128xf32>
    %18 = vector.broadcast %17 : vector<1x128xf32> to vector<8x128xf32>
    %19 = arith.addf %16, %18 : vector<8x128xf32>
    %cst_17 = arith.constant dense<0xFF800000> : vector<8xf32>
    %20 = vector.multi_reduction <maximumf>, %19, %cst_17 [1] : vector<8x128xf32> to vector<8xf32>
    %21 = vector.shape_cast %20 : vector<8xf32> to vector<8x1xf32>
    %22 = vector.broadcast %21 : vector<8x1xf32> to vector<8x128xf32>
    %23 = arith.subf %19, %22 : vector<8x128xf32>
    %24 = math.exp %23 : vector<8x128xf32>
    %c0_18 = arith.constant 0 : index
    %c0_19 = arith.constant 0 : index
    %25 = vector.load %arg8[%c0_18, %c0_19] : memref<128x128xf32, #tpu.memory_space<vmem>>, vector<128x128xf32>
    %cst_20 = arith.constant dense<0.000000e+00> : vector<8x128xf32>
    %26 = tpu.matmul %24, %25, %cst_20 {dimension_numbers = #tpu.dot_dimension_numbers<[1], [0], [0], [1], [0, 0, 1, 1], [], []>} : vector<8x128xf32>, vector<128x128xf32>, vector<8x128xf32> -> vector<8x128xf32>
    %27 = tpu.reciprocal %26 {approx = true} : vector<8x128xf32> -> vector<8x128xf32>
    %28 = arith.mulf %24, %27 : vector<8x128xf32>
    %c0_21 = arith.constant 0 : index
    %c0_22 = arith.constant 0 : index
    %29 = vector.load %arg9[%c0_21, %c0_22] : memref<8x128xf32, #tpu.memory_space<vmem>>, vector<8x128xf32>
    tpu.vector_store %arg9[%c0_21, %c0_22], %28 {strides = array<i32>} : memref<8x128xf32, #tpu.memory_space<vmem>>, vector<8x128xf32>,
    return
  }
  func.func @transform_0(%arg0: i32) -> (i32, i32) {
    %c0_i32 = arith.constant 0 : i32
    %c0_i32_0 = arith.constant 0 : i32
    return %arg0, %c0_i32 : i32, i32
  }
  func.func @transform_1(%arg0: i32) -> (i32, i32) {
    %c0_i32 = arith.constant 0 : i32
    %c0_i32_0 = arith.constant 0 : i32
    %c0_i32_1 = arith.constant 0 : i32
    return %c0_i32, %c0_i32_0 : i32, i32
  }
  func.func @transform_2(%arg0: i32) -> (i32, i32) {
    %c0_i32 = arith.constant 0 : i32
    %c0_i32_0 = arith.constant 0 : i32
    %c0_i32_1 = arith.constant 0 : i32
    return %c0_i32, %c0_i32_0 : i32, i32
  }
  func.func @transform_3(%arg0: i32) -> (i32, i32) {
    %c0_i32 = arith.constant 0 : i32
    %c0_i32_0 = arith.constant 0 : i32
    %c0_i32_1 = arith.constant 0 : i32
    return %c0_i32, %c0_i32_0 : i32, i32
  }
  func.func @transform_4(%arg0: i32) -> (i32, i32) {
    %c0_i32 = arith.constant 0 : i32
    %c0_i32_0 = arith.constant 0 : i32
    %c0_i32_1 = arith.constant 0 : i32
    return %c0_i32, %c0_i32_0 : i32, i32
  }
  func.func @transform_5(%arg0: i32) -> (i32, i32) {
    %c0_i32 = arith.constant 0 : i32
    %c0_i32_0 = arith.constant 0 : i32
    %c0_i32_1 = arith.constant 0 : i32
    return %c0_i32, %c0_i32_0 : i32, i32
  }
  func.func @transform_6(%arg0: i32) -> (i32, i32) {
    %c0_i32 = arith.constant 0 : i32
    %c0_i32_0 = arith.constant 0 : i32
    %c0_i32_1 = arith.constant 0 : i32
    return %c0_i32, %c0_i32_0 : i32, i32
  }
  func.func @transform_7(%arg0: i32) -> (i32, i32) {
    %c0_i32 = arith.constant 0 : i32
    %c0_i32_0 = arith.constant 0 : i32
    %c0_i32_1 = arith.constant 0 : i32
    return %c0_i32, %c0_i32_0 : i32, i32
  }
  func.func @transform_8(%arg0: i32) -> (i32, i32) {
    %c0_i32 = arith.constant 0 : i32
    %c0_i32_0 = arith.constant 0 : i32
    return %arg0, %c0_i32 : i32, i32
  }
}

</mosaic_0001>

<llo_original>
// kernel: forward.1
$region0: #{forward.1}
  #allocation0 [shape = 'u32[]', space=smem, size = 0x4, offset = 0x4, fixed_abs, tag = 'smem constant byte address 0x4 - core index']
  #allocation1 [shape = 'u32[144,128]{1,0:T(1,128)}', space=vmem, size = 0x12000, scoped, tag = 'internal scratch']
  %s0 = inlined_call_operand.vmem [shape: f32[8,32], index: 0, kind: input, shape index: {}]
  %s1 = inlined_call_operand.hbm [shape: f32[32,512], index: 1, kind: input, shape index: {}]
  %s2 = inlined_call_operand.vmem [shape: f32[1,512], index: 2, kind: input, shape index: {}]
  %s3 = inlined_call_operand.hbm [shape: f32[512,384], index: 3, kind: input, shape index: {}]
  %s4 = inlined_call_operand.vmem [shape: f32[1,384], index: 4, kind: input, shape index: {}]
  %s5 = inlined_call_operand.hbm [shape: f32[384,128], index: 5, kind: input, shape index: {}]
  %s6 = inlined_call_operand.vmem [shape: f32[1,128], index: 6, kind: input, shape index: {}]
  %s7 = inlined_call_operand.hbm [shape: f32[128,128], index: 7, kind: input, shape index: {}]
  %s8 = inlined_call_operand.vmem [shape: f32[8,128], index: 8, kind: output, shape index: {}]
  %s9 = sld [smem:[#allocation0]]
  $region58: #{forward.1} parent=0
    _
  %s11 = ssub.s32 1, %s9
  %s12 = scalar_select 0, %s11, %s9
  $region1: #{forward.1} parent=0
    #allocation2 [shape = 'u8[65536]{0}', space=vmem, size = 0x10000, scoped, tag = 'input window, operand 1, single buffered']
    #allocation3 [shape = 's32[1]{0}', space=sflag, size = 0x4, scoped, tag = 'scoped memory for forward.1']
    #allocation4 [shape = 'u8[786432]{0}', space=vmem, size = 0xc0000, scoped, tag = 'input window, operand 3, single buffered']
    #allocation5 [shape = 's32[1]{0}', space=sflag, size = 0x4, scoped, tag = 'scoped memory for forward.1']
    #allocation6 [shape = 'u8[196608]{0}', space=vmem, size = 0x30000, scoped, tag = 'input window, operand 5, single buffered']
    #allocation7 [shape = 'u8[65536]{0}', space=vmem, size = 0x10000, scoped, tag = 'input window, operand 7, single buffered']
    #allocation8 [shape = 's32[1]{0}', space=sflag, size = 0x4, scoped, tag = 'scoped memory for forward.1']
    %13 = vsyncpa [#allocation3], 0
    %14 = vsyncpa [#allocation5], 0
    %15 = vsyncpa [#allocation8], 0
    // Predicated region
    $region2: #{forward.1} parent=1 // pred_check
      _
    $region3: #{forward.1} parent=1 // pred_check_branch
      %17 = sbr.rel (0) target = $region5
    $region4: #{forward.1} parent=1 // pred_region
      _
    $region5: #{forward.1} parent=1 // pred_fallthru
      _
    // Predicated region
    $region6: #{forward.1} parent=1 // pred_check
      _
    $region7: #{forward.1} parent=1 // pred_check_branch
      %19 = sbr.rel (0) target = $region9
    $region8: #{forward.1} parent=1 // pred_region
      %s21 = ssub.s32 2048, 2048
      %22 = vsyncadd [#allocation3], %s21
      %s23 = sshll.u32 [#allocation2], 4
      %s24 = int_to_ptr.vmem [resolvable:$true] %s23
      %29 = dma.hbm_to_vmem [thread:$0]  %s1, 2048, %s24, [#allocation3], 512, 512, 32
    $region9: #{forward.1} parent=1 // pred_fallthru
      _
    // Predicated region
    $region10: #{forward.1} parent=1 // pred_check
      _
    $region11: #{forward.1} parent=1 // pred_check_branch
      %31 = sbr.rel (0) target = $region13
    $region12: #{forward.1} parent=1 // pred_region
      _
    $region13: #{forward.1} parent=1 // pred_fallthru
      _
    // Predicated region
    $region14: #{forward.1} parent=1 // pred_check
      _
    $region15: #{forward.1} parent=1 // pred_check_branch
      %33 = sbr.rel (0) target = $region17
    $region16: #{forward.1} parent=1 // pred_region
      %s35 = ssub.s32 24576, 24576
      %36 = vsyncadd [#allocation5], %s35
      %s37 = sshll.u32 [#allocation4], 4
      %s38 = int_to_ptr.vmem [resolvable:$true] %s37
      %43 = dma.hbm_to_vmem [thread:$0]  %s3, 24576, %s38, [#allocation5], 384, 384, 24
    $region17: #{forward.1} parent=1 // pred_fallthru
      _
    // Predicated region
    $region18: #{forward.1} parent=1 // pred_check
      _
    $region19: #{forward.1} parent=1 // pred_check_branch
      %45 = sbr.rel (0) target = $region21
    $region20: #{forward.1} parent=1 // pred_region
      _
    $region21: #{forward.1} parent=1 // pred_fallthru
      _
    // Predicated region
    $region22: #{forward.1} parent=1 // pred_check
      _
    $region23: #{forward.1} parent=1 // pred_check_branch
      %47 = sbr.rel (0) target = $region25
    $region24: #{forward.1} parent=1 // pred_region
      %s49 = ssub.s32 6144, 6144
      %50 = vsyncadd [#allocation5], %s49
      %s51 = sshll.u32 [#allocation6], 4
      %s52 = int_to_ptr.vmem [resolvable:$true] %s51
      %57 = dma.hbm_to_vmem [thread:$0]  %s5, 6144, %s52, [#allocation5], 128, 128, 8
    $region25: #{forward.1} parent=1 // pred_fallthru
      _
    // Predicated region
    $region26: #{forward.1} parent=1 // pred_check
      _
    $region27: #{forward.1} parent=1 // pred_check_branch
      %59 = sbr.rel (0) target = $region29
    $region28: #{forward.1} parent=1 // pred_region
      _
    $region29: #{forward.1} parent=1 // pred_fallthru
      _
    // Predicated region
    $region30: #{forward.1} parent=1 // pred_check
      _
    $region31: #{forward.1} parent=1 // pred_check_branch
      %61 = sbr.rel (0) target = $region33
    $region32: #{forward.1} parent=1 // pred_region
      %s63 = ssub.s32 2048, 2048
      %64 = vsyncadd [#allocation8], %s63
      %s65 = sshll.u32 [#allocation7], 4
      %s66 = int_to_ptr.vmem [resolvable:$true] %s65
      %71 = dma.hbm_to_vmem [thread:$0]  %s7, 2048, %s66, [#allocation8], 128, 128, 8
    $region33: #{forward.1} parent=1 // pred_fallthru
      _
    // Predicated region
    $region34: #{forward.1} parent=1 // pred_check
      _
    $region35: #{forward.1} parent=1 // pred_check_branch
      %73 = sbr.rel (0) target = $region37
    $region36: #{forward.1} parent=1 // pred_region
      %74 = dma.done [#allocation3], 2048
    $region37: #{forward.1} parent=1 // pred_fallthru
      _
    // Predicated region
    $region38: #{forward.1} parent=1 // pred_check
      _
    $region39: #{forward.1} parent=1 // pred_check_branch
      %76 = sbr.rel (0) target = $region41
    $region40: #{forward.1} parent=1 // pred_region
      %77 = dma.done [#allocation5], 24576
    $region41: #{forward.1} parent=1 // pred_fallthru
      _
    // Predicated region
    $region42: #{forward.1} parent=1 // pred_check
      _
    $region43: #{forward.1} parent=1 // pred_check_branch
      %79 = sbr.rel (0) target = $region45
    $region44: #{forward.1} parent=1 // pred_region
      %80 = dma.done [#allocation5], 6144
    $region45: #{forward.1} parent=1 // pred_fallthru
      _
    // Predicated region
    $region46: #{forward.1} parent=1 // pred_check
      _
    $region47: #{forward.1} parent=1 // pred_check_branch
      %82 = sbr.rel (0) target = $region49
    $region48: #{forward.1} parent=1 // pred_region
      %83 = dma.done [#allocation8], 2048
    $region49: #{forward.1} parent=1 // pred_fallthru
      _
    %v84 = vld [vmem:[%s0] sm:$0xff]
    %v85 = vld [vmem:[#allocation2] sm:$0xff]
    %v86 = vld [vmem:[#allocation2 + $0x8] sm:$0xff]
    %v87 = vld [vmem:[#allocation2 + $0x10] sm:$0xff]
    %v88 = vld [vmem:[#allocation2 + $0x18] sm:$0xff]
    %v89 = vld [vmem:[#allocation2 + $0x20] sm:$0xff]
    %v90 = vld [vmem:[#allocation2 + $0x28] sm:$0xff]
    %v91 = vld [vmem:[#allocation2 + $0x30] sm:$0xff]
    %v92 = vld [vmem:[#allocation2 + $0x38] sm:$0xff]
    %v93 = vld [vmem:[#allocation2 + $0x40] sm:$0xff]
    %v94 = vld [vmem:[#allocation2 + $0x48] sm:$0xff]
    %v95 = vld [vmem:[#allocation2 + $0x50] sm:$0xff]
    %v96 = vld [vmem:[#allocation2 + $0x58] sm:$0xff]
    %v97 = vld [vmem:[#allocation2 + $0x60] sm:$0xff]
    %v98 = vld [vmem:[#allocation2 + $0x68] sm:$0xff]
    %v99 = vld [vmem:[#allocation2 + $0x70] sm:$0xff]
    %v100 = vld [vmem:[#allocation2 + $0x78] sm:$0xff]
    %v101 = vld [vmem:[%s2] sm:$0xf]
    %v103 = vlaneseq
    %v104 = vshrl.u32 %v103, 7
    %v105 = vsub.s32 0, %v104
    %v106 = vrot.slane %v101, %v105
    %v107 = vlaneseq
    %v108 = vshrl.u32 %v107, 7
    %v109 = vsub.s32 1, %v108
    %v110 = vrot.slane %v101, %v109
    %v111 = vlaneseq
    %v112 = vshrl.u32 %v111, 7
    %v113 = vsub.s32 2, %v112
    %v114 = vrot.slane %v101, %v113
    %v115 = vlaneseq
    %v116 = vshrl.u32 %v115, 7
    %v117 = vsub.s32 3, %v116
    %v118 = vrot.slane %v101, %v117
    %vm123 = vcmask 261120
    %v125 = vsel %vm123, %v84, 0
    %127 = vmatprep.subr.mxu0 %v86
    %128 = vmatpush1.msra.mxu0 %v85
    %129 = vmatprep.subr.mxu0 %v90
    %130 = vmatpush1.msra.mxu0 %v89
    %131 = vmatprep.subr.mxu0 %v94
    %132 = vmatpush1.msra.mxu0 %v93
    %133 = vmatprep.subr.mxu0 %v98
    %134 = vmatpush1.msra.mxu0 %v97
    %135 = vmatprep.subr.mxu0 0.0
    %136 = vmatpush1.msra.mxu0 0.0
    %137 = vmatprep.subr.mxu0 0.0
    %138 = vmatpush1.msra.mxu0 0.0
    %139 = vmatprep.subr.mxu0 0.0
    %140 = vmatpush1.msra.mxu0 0.0
    %141 = vmatprep.subr.mxu0 0.0
    %142 = vmatpush1.msra.mxu0 0.0
    %143 = vmatprep.subr.mxu0 0.0
    %144 = vmatpush1.msra.mxu0 0.0
    %145 = vmatprep.subr.mxu0 0.0
    %146 = vmatpush1.msra.mxu0 0.0
    %147 = vmatprep.subr.mxu0 0.0
    %148 = vmatpush1.msra.mxu0 0.0
    %149 = vmatprep.subr.mxu0 0.0
    %150 = vmatpush1.msra.mxu0 0.0
    %151 = vmatprep.subr.mxu0 0.0
    %152 = vmatpush1.msra.mxu0 0.0
    %153 = vmatprep.subr.mxu0 0.0
    %154 = vmatpush1.msra.mxu0 0.0
    %155 = vmatprep.subr.mxu0 0.0
    %156 = vmatpush1.msra.mxu0 0.0
    %157 = vmatprep.subr.mxu0 0.0
    %158 = vmatpush1.msra.mxu0 0.0
    %159 = vmatprep.subr.mxu0 0.0
    %160 = vmatpush1.msra.mxu0 0.0
    %161 = vmatprep.subr.mxu0 0.0
    %162 = vmatpush1.msra.mxu0 0.0
    %163 = vmatprep.subr.mxu0 0.0
    %164 = vmatpush1.msra.mxu0 0.0
    %165 = vmatprep.subr.mxu0 0.0
    %166 = vmatpush1.msra.mxu0 0.0
    %167 = vmatprep.subr.mxu0 0.0
    %168 = vmatpush1.msra.mxu0 0.0
    %169 = vmatprep.subr.mxu0 0.0
    %170 = vmatpush1.msra.mxu0 0.0
    %171 = vmatprep.subr.mxu0 0.0
    %172 = vmatpush1.msra.mxu0 0.0
    %173 = vmatprep.subr.mxu0 0.0
    %174 = vmatpush1.msra.mxu0 0.0
    %175 = vmatprep.subr.mxu0 0.0
    %176 = vmatpush1.msra.mxu0 0.0
    %177 = vmatprep.subr.mxu0 0.0
    %178 = vmatpush1.msra.mxu0 0.0
    %179 = vmatprep.subr.mxu0 0.0
    %180 = vmatpush1.msra.mxu0 0.0
    %181 = vmatprep.subr.mxu0 0.0
    %182 = vmatpush1.msra.mxu0 0.0
    %183 = vmatprep.subr.mxu0 0.0
    %184 = vmatpush1.msra.mxu0 0.0
    %185 = vmatprep.subr.mxu0 0.0
    %186 = vmatpush1.msra.mxu0 0.0
    %187 = vmatprep.subr.mxu0 0.0
    %188 = vmatpush1.msra.mxu0 0.0
    %189 = vmatprep.subr.mxu0 0.0
    %190 = vmatpush1.msra.mxu0 0.0
    %191 = vmatprep.mubr.f32.mxu0 0.0
    %192 = vmatmul.mubr.f32.gmra.mrb[0].mxu0 %v125
    %v193 = vpop.f32.mrb[0].mxu0
    %v194 = vadd.f32 %v106, %v193
    %v195 = vpop.f32.mrb[0].mxu0
    %v196 = vadd.f32 %v110, %v195
    %197 = vdwg.mxu0
    %198 = vmatprep.subr.mxu0 %v88
    %199 = vmatpush1.msra.mxu0 %v87
    %200 = vmatprep.subr.mxu0 %v92
    %201 = vmatpush1.msra.mxu0 %v91
    %202 = vmatprep.subr.mxu0 %v96
    %203 = vmatpush1.msra.mxu0 %v95
    %204 = vmatprep.subr.mxu0 %v100
    %205 = vmatpush1.msra.mxu0 %v99
    %206 = vmatprep.subr.mxu0 0.0
    %207 = vmatpush1.msra.mxu0 0.0
    %208 = vmatprep.subr.mxu0 0.0
    %209 = vmatpush1.msra.mxu0 0.0
    %210 = vmatprep.subr.mxu0 0.0
    %211 = vmatpush1.msra.mxu0 0.0
    %212 = vmatprep.subr.mxu0 0.0
    %213 = vmatpush1.msra.mxu0 0.0
    %214 = vmatprep.subr.mxu0 0.0
    %215 = vmatpush1.msra.mxu0 0.0
    %216 = vmatprep.subr.mxu0 0.0
    %217 = vmatpush1.msra.mxu0 0.0
    %218 = vmatprep.subr.mxu0 0.0
    %219 = vmatpush1.msra.mxu0 0.0
    %220 = vmatprep.subr.mxu0 0.0
    %221 = vmatpush1.msra.mxu0 0.0
    %222 = vmatprep.subr.mxu0 0.0
    %223 = vmatpush1.msra.mxu0 0.0
    %224 = vmatprep.subr.mxu0 0.0
    %225 = vmatpush1.msra.mxu0 0.0
    %226 = vmatprep.subr.mxu0 0.0
    %227 = vmatpush1.msra.mxu0 0.0
    %228 = vmatprep.subr.mxu0 0.0
    %229 = vmatpush1.msra.mxu0 0.0
    %230 = vmatprep.subr.mxu0 0.0
    %231 = vmatpush1.msra.mxu0 0.0
    %232 = vmatprep.subr.mxu0 0.0
    %233 = vmatpush1.msra.mxu0 0.0
    %234 = vmatprep.subr.mxu0 0.0
    %235 = vmatpush1.msra.mxu0 0.0
    %236 = vmatprep.subr.mxu0 0.0
    %237 = vmatpush1.msra.mxu0 0.0
    %238 = vmatprep.subr.mxu0 0.0
    %239 = vmatpush1.msra.mxu0 0.0
    %240 = vmatprep.subr.mxu0 0.0
    %241 = vmatpush1.msra.mxu0 0.0
    %242 = vmatprep.subr.mxu0 0.0
    %243 = vmatpush1.msra.mxu0 0.0
    %244 = vmatprep.subr.mxu0 0.0
    %245 = vmatpush1.msra.mxu0 0.0
    %246 = vmatprep.subr.mxu0 0.0
    %247 = vmatpush1.msra.mxu0 0.0
    %248 = vmatprep.subr.mxu0 0.0
    %249 = vmatpush1.msra.mxu0 0.0
    %250 = vmatprep.subr.mxu0 0.0
    %251 = vmatpush1.msra.mxu0 0.0
    %252 = vmatprep.subr.mxu0 0.0
    %253 = vmatpush1.msra.mxu0 0.0
    %254 = vmatprep.subr.mxu0 0.0
    %255 = vmatpush1.msra.mxu0 0.0
    %256 = vmatprep.subr.mxu0 0.0
    %257 = vmatpush1.msra.mxu0 0.0
    %258 = vmatprep.subr.mxu0 0.0
    %259 = vmatpush1.msra.mxu0 0.0
    %260 = vmatprep.subr.mxu0 0.0
    %261 = vmatpush1.msra.mxu0 0.0
    %262 = vmatprep.mubr.f32.mxu0 0.0
    %263 = vmatmul.mubr.f32.gmra.mrb[0].mxu0 %v125
    %v264 = vpop.f32.mrb[0].mxu0
    %v265 = vadd.f32 %v114, %v264
    %v266 = vpop.f32.mrb[0].mxu0
    %v267 = vadd.f32 %v118, %v266
    %268 = vdwg.mxu0
    %v269 = vmax.f32 %v194, 0.0
    %v270 = vmax.f32 %v196, 0.0
    %v271 = vmax.f32 %v265, 0.0
    %v272 = vmax.f32 %v267, 0.0
    %v273 = vld [vmem:[#allocation4] sm:$0xff]
    %v274 = vld [vmem:[#allocation4 + $0x8] sm:$0xff]
    %v275 = vld [vmem:[#allocation4 + $0x10] sm:$0xff]
    %v276 = vld [vmem:[#allocation4 + $0x18] sm:$0xff]
    %v277 = vld [vmem:[#allocation4 + $0x20] sm:$0xff]
    %v278 = vld [vmem:[#allocation4 + $0x28] sm:$0xff]
    %v279 = vld [vmem:[#allocation4 + $0x30] sm:$0xff]
    %v280 = vld [vmem:[#allocation4 + $0x38] sm:$0xff]
    %v281 = vld [vmem:[#allocation4 + $0x40] sm:$0xff]
    %v282 = vld [vmem:[#allocation4 + $0x48] sm:$0xff]
    %v283 = vld [vmem:[#allocation4 + $0x50] sm:$0xff]
    %v284 = vld [vmem:[#allocation4 + $0x58] sm:$0xff]
    %v285 = vld [vmem:[#allocation4 + $0x60] sm:$0xff]
    %v286 = vld [vmem:[#allocation4 + $0x68] sm:$0xff]
    %v287 = vld [vmem:[#allocation4 + $0x70] sm:$0xff]
    %v288 = vld [vmem:[#allocation4 + $0x78] sm:$0xff]
    %v289 = vld [vmem:[#allocation4 + $0x80] sm:$0xff]
    %v290 = vld [vmem:[#allocation4 + $0x88] sm:$0xff]
    %v291 = vld [vmem:[#allocation4 + $0x90] sm:$0xff]
    %v292 = vld [vmem:[#allocation4 + $0x98] sm:$0xff]
    %v293 = vld [vmem:[#allocation4 + $0xa0] sm:$0xff]
    %v294 = vld [vmem:[#allocation4 + $0xa8] sm:$0xff]
    %v295 = vld [vmem:[#allocation4 + $0xb0] sm:$0xff]
    %v296 = vld [vmem:[#allocation4 + $0xb8] sm:$0xff]
    %v297 = vld [vmem:[#allocation4 + $0xc0] sm:$0xff]
    %v298 = vld [vmem:[#allocation4 + $0xc8] sm:$0xff]
    %v299 = vld [vmem:[#allocation4 + $0xd0] sm:$0xff]
    %v300 = vld [vmem:[#allocation4 + $0xd8] sm:$0xff]
    %v301 = vld [vmem:[#allocation4 + $0xe0] sm:$0xff]
    %v302 = vld [vmem:[#allocation4 + $0xe8] sm:$0xff]
    %v303 = vld [vmem:[#allocation4 + $0xf0] sm:$0xff]
    %v304 = vld [vmem:[#allocation4 + $0xf8] sm:$0xff]
    %v305 = vld [vmem:[#allocation4 + $0x100] sm:$0xff]
    %v306 = vld [vmem:[#allocation4 + $0x108] sm:$0xff]
    %v307 = vld [vmem:[#allocation4 + $0x110] sm:$0xff]
    %v308 = vld [vmem:[#allocation4 + $0x118] sm:$0xff]
    %v309 = vld [vmem:[#allocation4 + $0x120] sm:$0xff]
    %v310 = vld [vmem:[#allocation4 + $0x128] sm:$0xff]
    %v311 = vld [vmem:[#allocation4 + $0x130] sm:$0xff]
    %v312 = vld [vmem:[#allocation4 + $0x138] sm:$0xff]
    %v313 = vld [vmem:[#allocation4 + $0x140] sm:$0xff]
    %v314 = vld [vmem:[#allocation4 + $0x148] sm:$0xff]
    %v315 = vld [vmem:[#allocation4 + $0x150] sm:$0xff]
    %v316 = vld [vmem:[#allocation4 + $0x158] sm:$0xff]
    %v317 = vld [vmem:[#allocation4 + $0x160] sm:$0xff]
    %v318 = vld [vmem:[#allocation4 + $0x168] sm:$0xff]
    %v319 = vld [vmem:[#allocation4 + $0x170] sm:$0xff]
    %v320 = vld [vmem:[#allocation4 + $0x178] sm:$0xff]
    %v321 = vld [vmem:[#allocation4 + $0x180] sm:$0xff]
    %v322 = vld [vmem:[#allocation4 + $0x188] sm:$0xff]
    %v323 = vld [vmem:[#allocation4 + $0x190] sm:$0xff]
    %v324 = vld [vmem:[#allocation4 + $0x198] sm:$0xff]
    %v325 = vld [vmem:[#allocation4 + $0x1a0] sm:$0xff]
    %v326 = vld [vmem:[#allocation4 + $0x1a8] sm:$0xff]
    %v327 = vld [vmem:[#allocation4 + $0x1b0] sm:$0xff]
    %v328 = vld [vmem:[#allocation4 + $0x1b8] sm:$0xff]
    %v329 = vld [vmem:[#allocation4 + $0x1c0] sm:$0xff]
    %v330 = vld [vmem:[#allocation4 + $0x1c8] sm:$0xff]
    %v331 = vld [vmem:[#allocation4 + $0x1d0] sm:$0xff]
    %v332 = vld [vmem:[#allocation4 + $0x1d8] sm:$0xff]
    %v333 = vld [vmem:[#allocation4 + $0x1e0] sm:$0xff]
    %v334 = vld [vmem:[#allocation4 + $0x1e8] sm:$0xff]
    %v335 = vld [vmem:[#allocation4 + $0x1f0] sm:$0xff]
    %v336 = vld [vmem:[#allocation4 + $0x1f8] sm:$0xff]
    %v337 = vld [vmem:[#allocation4 + $0x200] sm:$0xff]
    %v338 = vld [vmem:[#allocation4 + $0x208] sm:$0xff]
    %v339 = vld [vmem:[#allocation4 + $0x210] sm:$0xff]
    %v340 = vld [vmem:[#allocation4 + $0x218] sm:$0xff]
    %v341 = vld [vmem:[#allocation4 + $0x220] sm:$0xff]
    %v342 = vld [vmem:[#allocation4 + $0x228] sm:$0xff]
    %v343 = vld [vmem:[#allocation4 + $0x230] sm:$0xff]
    %v344 = vld [vmem:[#allocation4 + $0x238] sm:$0xff]
    %v345 = vld [vmem:[#allocation4 + $0x240] sm:$0xff]
    %v346 = vld [vmem:[#allocation4 + $0x248] sm:$0xff]
    %v347 = vld [vmem:[#allocation4 + $0x250] sm:$0xff]
    %v348 = vld [vmem:[#allocation4 + $0x258] sm:$0xff]
    %v349 = vld [vmem:[#allocation4 + $0x260] sm:$0xff]
    %v350 = vld [vmem:[#allocation4 + $0x268] sm:$0xff]
    %v351 = vld [vmem:[#allocation4 + $0x270] sm:$0xff]
    %v352 = vld [vmem:[#allocation4 + $0x278] sm:$0xff]
    %v353 = vld [vmem:[#allocation4 + $0x280] sm:$0xff]
    %v354 = vld [vmem:[#allocation4 + $0x288] sm:$0xff]
    %v355 = vld [vmem:[#allocation4 + $0x290] sm:$0xff]
    %v356 = vld [vmem:[#allocation4 + $0x298] sm:$0xff]
    %v357 = vld [vmem:[#allocation4 + $0x2a0] sm:$0xff]
    %v358 = vld [vmem:[#allocation4 + $0x2a8] sm:$0xff]
    %v359 = vld [vmem:[#allocation4 + $0x2b0] sm:$0xff]
    %v360 = vld [vmem:[#allocation4 + $0x2b8] sm:$0xff]
    %v361 = vld [vmem:[#allocation4 + $0x2c0] sm:$0xff]
    %v362 = vld [vmem:[#allocation4 + $0x2c8] sm:$0xff]
    %v363 = vld [vmem:[#allocation4 + $0x2d0] sm:$0xff]
    %v364 = vld [vmem:[#allocation4 + $0x2d8] sm:$0xff]
    %v365 = vld [vmem:[#allocation4 + $0x2e0] sm:$0xff]
    %v366 = vld [vmem:[#allocation4 + $0x2e8] sm:$0xff]
    %v367 = vld [vmem:[#allocation4 + $0x2f0] sm:$0xff]
    %v368 = vld [vmem:[#allocation4 + $0x2f8] sm:$0xff]
    %v369 = vld [vmem:[#allocation4 + $0x300] sm:$0xff]
    %v370 = vld [vmem:[#allocation4 + $0x308] sm:$0xff]
    %v371 = vld [vmem:[#allocation4 + $0x310] sm:$0xff]
    %v372 = vld [vmem:[#allocation4 + $0x318] sm:$0xff]
    %v373 = vld [vmem:[#allocation4 + $0x320] sm:$0xff]
    %v374 = vld [vmem:[#allocation4 + $0x328] sm:$0xff]
    %v375 = vld [vmem:[#allocation4 + $0x330] sm:$0xff]
    %v376 = vld [vmem:[#allocation4 + $0x338] sm:$0xff]
    %v377 = vld [vmem:[#allocation4 + $0x340] sm:$0xff]
    %v378 = vld [vmem:[#allocation4 + $0x348] sm:$0xff]
    %v379 = vld [vmem:[#allocation4 + $0x350] sm:$0xff]
    %v380 = vld [vmem:[#allocation4 + $0x358] sm:$0xff]
    %v381 = vld [vmem:[#allocation4 + $0x360] sm:$0xff]
    %v382 = vld [vmem:[#allocation4 + $0x368] sm:$0xff]
    %v383 = vld [vmem:[#allocation4 + $0x370] sm:$0xff]
    %v384 = vld [vmem:[#allocation4 + $0x378] sm:$0xff]
    %v385 = vld [vmem:[#allocation4 + $0x380] sm:$0xff]
    %v386 = vld [vmem:[#allocation4 + $0x388] sm:$0xff]
    %v387 = vld [vmem:[#allocation4 + $0x390] sm:$0xff]
    %v388 = vld [vmem:[#allocation4 + $0x398] sm:$0xff]
    %v389 = vld [vmem:[#allocation4 + $0x3a0] sm:$0xff]
    %v390 = vld [vmem:[#allocation4 + $0x3a8] sm:$0xff]
    %v391 = vld [vmem:[#allocation4 + $0x3b0] sm:$0xff]
    %v392 = vld [vmem:[#allocation4 + $0x3b8] sm:$0xff]
    %v393 = vld [vmem:[#allocation4 + $0x3c0] sm:$0xff]
    %v394 = vld [vmem:[#allocation4 + $0x3c8] sm:$0xff]
    %v395 = vld [vmem:[#allocation4 + $0x3d0] sm:$0xff]
    %v396 = vld [vmem:[#allocation4 + $0x3d8] sm:$0xff]
    %v397 = vld [vmem:[#allocation4 + $0x3e0] sm:$0xff]
    %v398 = vld [vmem:[#allocation4 + $0x3e8] sm:$0xff]
    %v399 = vld [vmem:[#allocation4 + $0x3f0] sm:$0xff]
    %v400 = vld [vmem:[#allocation4 + $0x3f8] sm:$0xff]
    %v401 = vld [vmem:[#allocation4 + $0x400] sm:$0xff]
    %v402 = vld [vmem:[#allocation4 + $0x408] sm:$0xff]
    %v403 = vld [vmem:[#allocation4 + $0x410] sm:$0xff]
    %v404 = vld [vmem:[#allocation4 + $0x418] sm:$0xff]
    %v405 = vld [vmem:[#allocation4 + $0x420] sm:$0xff]
    %v406 = vld [vmem:[#allocation4 + $0x428] sm:$0xff]
    %v407 = vld [vmem:[#allocation4 + $0x430] sm:$0xff]
    %v408 = vld [vmem:[#allocation4 + $0x438] sm:$0xff]
    %v409 = vld [vmem:[#allocation4 + $0x440] sm:$0xff]
    %v410 = vld [vmem:[#allocation4 + $0x448] sm:$0xff]
    %v411 = vld [vmem:[#allocation4 + $0x450] sm:$0xff]
    %v412 = vld [vmem:[#allocation4 + $0x458] sm:$0xff]
    %v413 = vld [vmem:[#allocation4 + $0x460] sm:$0xff]
    %v414 = vld [vmem:[#allocation4 + $0x468] sm:$0xff]
    %v415 = vld [vmem:[#allocation4 + $0x470] sm:$0xff]
    %v416 = vld [vmem:[#allocation4 + $0x478] sm:$0xff]
    %v417 = vld [vmem:[#allocation4 + $0x480] sm:$0xff]
    %v418 = vld [vmem:[#allocation4 + $0x488] sm:$0xff]
    %v419 = vld [vmem:[#allocation4 + $0x490] sm:$0xff]
    %v420 = vld [vmem:[#allocation4 + $0x498] sm:$0xff]
    %v421 = vld [vmem:[#allocation4 + $0x4a0] sm:$0xff]
    %v422 = vld [vmem:[#allocation4 + $0x4a8] sm:$0xff]
    %v423 = vld [vmem:[#allocation4 + $0x4b0] sm:$0xff]
    %v424 = vld [vmem:[#allocation4 + $0x4b8] sm:$0xff]
    %v425 = vld [vmem:[#allocation4 + $0x4c0] sm:$0xff]
    %v426 = vld [vmem:[#allocation4 + $0x4c8] sm:$0xff]
    %v427 = vld [vmem:[#allocation4 + $0x4d0] sm:$0xff]
    %v428 = vld [vmem:[#allocation4 + $0x4d8] sm:$0xff]
    %v429 = vld [vmem:[#allocation4 + $0x4e0] sm:$0xff]
    %v430 = vld [vmem:[#allocation4 + $0x4e8] sm:$0xff]
    %v431 = vld [vmem:[#allocation4 + $0x4f0] sm:$0xff]
    %v432 = vld [vmem:[#allocation4 + $0x4f8] sm:$0xff]
    %v433 = vld [vmem:[#allocation4 + $0x500] sm:$0xff]
    %v434 = vld [vmem:[#allocation4 + $0x508] sm:$0xff]
    %v435 = vld [vmem:[#allocation4 + $0x510] sm:$0xff]
    %v436 = vld [vmem:[#allocation4 + $0x518] sm:$0xff]
    %v437 = vld [vmem:[#allocation4 + $0x520] sm:$0xff]
    %v438 = vld [vmem:[#allocation4 + $0x528] sm:$0xff]
    %v439 = vld [vmem:[#allocation4 + $0x530] sm:$0xff]
    %v440 = vld [vmem:[#allocation4 + $0x538] sm:$0xff]
    %v441 = vld [vmem:[#allocation4 + $0x540] sm:$0xff]
    %v442 = vld [vmem:[#allocation4 + $0x548] sm:$0xff]
    %v443 = vld [vmem:[#allocation4 + $0x550] sm:$0xff]
    %v444 = vld [vmem:[#allocation4 + $0x558] sm:$0xff]
    %v445 = vld [vmem:[#allocation4 + $0x560] sm:$0xff]
    %v446 = vld [vmem:[#allocation4 + $0x568] sm:$0xff]
    %v447 = vld [vmem:[#allocation4 + $0x570] sm:$0xff]
    %v448 = vld [vmem:[#allocation4 + $0x578] sm:$0xff]
    %v449 = vld [vmem:[#allocation4 + $0x580] sm:$0xff]
    %v450 = vld [vmem:[#allocation4 + $0x588] sm:$0xff]
    %v451 = vld [vmem:[#allocation4 + $0x590] sm:$0xff]
    %v452 = vld [vmem:[#allocation4 + $0x598] sm:$0xff]
    %v453 = vld [vmem:[#allocation4 + $0x5a0] sm:$0xff]
    %v454 = vld [vmem:[#allocation4 + $0x5a8] sm:$0xff]
    %v455 = vld [vmem:[#allocation4 + $0x5b0] sm:$0xff]
    %v456 = vld [vmem:[#allocation4 + $0x5b8] sm:$0xff]
    %v457 = vld [vmem:[#allocation4 + $0x5c0] sm:$0xff]
    %v458 = vld [vmem:[#allocation4 + $0x5c8] sm:$0xff]
    %v459 = vld [vmem:[#allocation4 + $0x5d0] sm:$0xff]
    %v460 = vld [vmem:[#allocation4 + $0x5d8] sm:$0xff]
    %v461 = vld [vmem:[#allocation4 + $0x5e0] sm:$0xff]
    %v462 = vld [vmem:[#allocation4 + $0x5e8] sm:$0xff]
    %v463 = vld [vmem:[#allocation4 + $0x5f0] sm:$0xff]
    %v464 = vld [vmem:[#allocation4 + $0x5f8] sm:$0xff]
    %v465 = vld [vmem:[%s4] sm:$0x7]
    %v467 = vlaneseq
    %v468 = vshrl.u32 %v467, 7
    %v469 = vsub.s32 0, %v468
    %v470 = vrot.slane %v465, %v469
    %v471 = vlaneseq
    %v472 = vshrl.u32 %v471, 7
    %v473 = vsub.s32 1, %v472
    %v474 = vrot.slane %v465, %v473
    %v475 = vlaneseq
    %v476 = vshrl.u32 %v475, 7
    %v477 = vsub.s32 2, %v476
    %v478 = vrot.slane %v465, %v477
    %482 = vmatprep.subr.mxu0 %v274
    %483 = vmatpush1.msra.mxu0 %v273
    %484 = vmatprep.subr.mxu0 %v277
    %485 = vmatpush1.msra.mxu0 %v276
    %486 = vmatprep.subr.mxu0 %v280
    %487 = vmatpush1.msra.mxu0 %v279
    %488 = vmatprep.subr.mxu0 %v283
    %489 = vmatpush1.msra.mxu0 %v282
    %490 = vmatprep.subr.mxu0 %v286
    %491 = vmatpush1.msra.mxu0 %v285
    %492 = vmatprep.subr.mxu0 %v289
    %493 = vmatpush1.msra.mxu0 %v288
    %494 = vmatprep.subr.mxu0 %v292
    %495 = vmatpush1.msra.mxu0 %v291
    %496 = vmatprep.subr.mxu0 %v295
    %497 = vmatpush1.msra.mxu0 %v294
    %498 = vmatprep.subr.mxu0 %v298
    %499 = vmatpush1.msra.mxu0 %v297
    %500 = vmatprep.subr.mxu0 %v301
    %501 = vmatpush1.msra.mxu0 %v300
    %502 = vmatprep.subr.mxu0 %v304
    %503 = vmatpush1.msra.mxu0 %v303
    %504 = vmatprep.subr.mxu0 %v307
    %505 = vmatpush1.msra.mxu0 %v306
    %506 = vmatprep.subr.mxu0 %v310
    %507 = vmatpush1.msra.mxu0 %v309
    %508 = vmatprep.subr.mxu0 %v313
    %509 = vmatpush1.msra.mxu0 %v312
    %510 = vmatprep.subr.mxu0 %v316
    %511 = vmatpush1.msra.mxu0 %v315
    %512 = vmatprep.subr.mxu0 %v319
    %513 = vmatpush1.msra.mxu0 %v318
    %514 = vmatprep.subr.mxu0 %v322
    %515 = vmatpush1.msra.mxu0 %v321
    %516 = vmatprep.subr.mxu0 %v325
    %517 = vmatpush1.msra.mxu0 %v324
    %518 = vmatprep.subr.mxu0 %v328
    %519 = vmatpush1.msra.mxu0 %v327
    %520 = vmatprep.subr.mxu0 %v331
    %521 = vmatpush1.msra.mxu0 %v330
    %522 = vmatprep.subr.mxu0 %v334
    %523 = vmatpush1.msra.mxu0 %v333
    %524 = vmatprep.subr.mxu0 %v337
    %525 = vmatpush1.msra.mxu0 %v336
    %526 = vmatprep.subr.mxu0 %v340
    %527 = vmatpush1.msra.mxu0 %v339
    %528 = vmatprep.subr.mxu0 %v343
    %529 = vmatpush1.msra.mxu0 %v342
    %530 = vmatprep.subr.mxu0 %v346
    %531 = vmatpush1.msra.mxu0 %v345
    %532 = vmatprep.subr.mxu0 %v349
    %533 = vmatpush1.msra.mxu0 %v348
    %534 = vmatprep.subr.mxu0 %v352
    %535 = vmatpush1.msra.mxu0 %v351
    %536 = vmatprep.subr.mxu0 %v355
    %537 = vmatpush1.msra.mxu0 %v354
    %538 = vmatprep.subr.mxu0 %v358
    %539 = vmatpush1.msra.mxu0 %v357
    %540 = vmatprep.subr.mxu0 %v361
    %541 = vmatpush1.msra.mxu0 %v360
    %542 = vmatprep.subr.mxu0 %v364
    %543 = vmatpush1.msra.mxu0 %v363
    %544 = vmatprep.subr.mxu0 %v367
    %545 = vmatpush1.msra.mxu0 %v366
    %546 = vmatprep.mubr.f32.mxu0 %v270
    %547 = vmatmul.mubr.f32.gmra.mrb[0].mxu0 %v269
    %v548 = vpop.f32.mrb[0].mxu0
    %v549 = vadd.f32 %v470, %v548
    %v550 = vpop.f32.mrb[0].mxu0
    %v551 = vadd.f32 %v474, %v550
    %552 = vdwg.mxu0
    %553 = vmatprep.subr.mxu0 %v370
    %554 = vmatpush1.msra.mxu0 %v369
    %555 = vmatprep.subr.mxu0 %v373
    %556 = vmatpush1.msra.mxu0 %v372
    %557 = vmatprep.subr.mxu0 %v376
    %558 = vmatpush1.msra.mxu0 %v375
    %559 = vmatprep.subr.mxu0 %v379
    %560 = vmatpush1.msra.mxu0 %v378
    %561 = vmatprep.subr.mxu0 %v382
    %562 = vmatpush1.msra.mxu0 %v381
    %563 = vmatprep.subr.mxu0 %v385
    %564 = vmatpush1.msra.mxu0 %v384
    %565 = vmatprep.subr.mxu0 %v388
    %566 = vmatpush1.msra.mxu0 %v387
    %567 = vmatprep.subr.mxu0 %v391
    %568 = vmatpush1.msra.mxu0 %v390
    %569 = vmatprep.subr.mxu0 %v394
    %570 = vmatpush1.msra.mxu0 %v393
    %571 = vmatprep.subr.mxu0 %v397
    %572 = vmatpush1.msra.mxu0 %v396
    %573 = vmatprep.subr.mxu0 %v400
    %574 = vmatpush1.msra.mxu0 %v399
    %575 = vmatprep.subr.mxu0 %v403
    %576 = vmatpush1.msra.mxu0 %v402
    %577 = vmatprep.subr.mxu0 %v406
    %578 = vmatpush1.msra.mxu0 %v405
    %579 = vmatprep.subr.mxu0 %v409
    %580 = vmatpush1.msra.mxu0 %v408
    %581 = vmatprep.subr.mxu0 %v412
    %582 = vmatpush1.msra.mxu0 %v411
    %583 = vmatprep.subr.mxu0 %v415
    %584 = vmatpush1.msra.mxu0 %v414
    %585 = vmatprep.subr.mxu0 %v418
    %586 = vmatpush1.msra.mxu0 %v417
    %587 = vmatprep.subr.mxu0 %v421
    %588 = vmatpush1.msra.mxu0 %v420
    %589 = vmatprep.subr.mxu0 %v424
    %590 = vmatpush1.msra.mxu0 %v423
    %591 = vmatprep.subr.mxu0 %v427
    %592 = vmatpush1.msra.mxu0 %v426
    %593 = vmatprep.subr.mxu0 %v430
    %594 = vmatpush1.msra.mxu0 %v429
    %595 = vmatprep.subr.mxu0 %v433
    %596 = vmatpush1.msra.mxu0 %v432
    %597 = vmatprep.subr.mxu0 %v436
    %598 = vmatpush1.msra.mxu0 %v435
    %599 = vmatprep.subr.mxu0 %v439
    %600 = vmatpush1.msra.mxu0 %v438
    %601 = vmatprep.subr.mxu0 %v442
    %602 = vmatpush1.msra.mxu0 %v441
    %603 = vmatprep.subr.mxu0 %v445
    %604 = vmatpush1.msra.mxu0 %v444
    %605 = vmatprep.subr.mxu0 %v448
    %606 = vmatpush1.msra.mxu0 %v447
    %607 = vmatprep.subr.mxu0 %v451
    %608 = vmatpush1.msra.mxu0 %v450
    %609 = vmatprep.subr.mxu0 %v454
    %610 = vmatpush1.msra.mxu0 %v453
    %611 = vmatprep.subr.mxu0 %v457
    %612 = vmatpush1.msra.mxu0 %v456
    %613 = vmatprep.subr.mxu0 %v460
    %614 = vmatpush1.msra.mxu0 %v459
    %615 = vmatprep.subr.mxu0 %v463
    %616 = vmatpush1.msra.mxu0 %v462
    %617 = vmatprep.mubr.f32.mxu0 %v272
    %618 = vmatmul.mubr.f32.gmra.mrb[0].mxu0 %v271
    %v619 = vpop.f32.mrb[0].mxu0
    %v620 = vadd.f32 %v549, %v619
    %v621 = vpop.f32.mrb[0].mxu0
    %v622 = vadd.f32 %v551, %v621
    %623 = vdwg.mxu0
    %624 = vmatprep.subr.mxu0 0.0
    %625 = vmatpush1.msra.mxu0 %v275
    %626 = vmatprep.subr.mxu0 0.0
    %627 = vmatpush1.msra.mxu0 %v278
    %628 = vmatprep.subr.mxu0 0.0
    %629 = vmatpush1.msra.mxu0 %v281
    %630 = vmatprep.subr.mxu0 0.0
    %631 = vmatpush1.msra.mxu0 %v284
    %632 = vmatprep.subr.mxu0 0.0
    %633 = vmatpush1.msra.mxu0 %v287
    %634 = vmatprep.subr.mxu0 0.0
    %635 = vmatpush1.msra.mxu0 %v290
    %636 = vmatprep.subr.mxu0 0.0
    %637 = vmatpush1.msra.mxu0 %v293
    %638 = vmatprep.subr.mxu0 0.0
    %639 = vmatpush1.msra.mxu0 %v296
    %640 = vmatprep.subr.mxu0 0.0
    %641 = vmatpush1.msra.mxu0 %v299
    %642 = vmatprep.subr.mxu0 0.0
    %643 = vmatpush1.msra.mxu0 %v302
    %644 = vmatprep.subr.mxu0 0.0
    %645 = vmatpush1.msra.mxu0 %v305
    %646 = vmatprep.subr.mxu0 0.0
    %647 = vmatpush1.msra.mxu0 %v308
    %648 = vmatprep.subr.mxu0 0.0
    %649 = vmatpush1.msra.mxu0 %v311
    %650 = vmatprep.subr.mxu0 0.0
    %651 = vmatpush1.msra.mxu0 %v314
    %652 = vmatprep.subr.mxu0 0.0
    %653 = vmatpush1.msra.mxu0 %v317
    %654 = vmatprep.subr.mxu0 0.0
    %655 = vmatpush1.msra.mxu0 %v320
    %656 = vmatprep.subr.mxu0 0.0
    %657 = vmatpush1.msra.mxu0 %v323
    %658 = vmatprep.subr.mxu0 0.0
    %659 = vmatpush1.msra.mxu0 %v326
    %660 = vmatprep.subr.mxu0 0.0
    %661 = vmatpush1.msra.mxu0 %v329
    %662 = vmatprep.subr.mxu0 0.0
    %663 = vmatpush1.msra.mxu0 %v332
    %664 = vmatprep.subr.mxu0 0.0
    %665 = vmatpush1.msra.mxu0 %v335
    %666 = vmatprep.subr.mxu0 0.0
    %667 = vmatpush1.msra.mxu0 %v338
    %668 = vmatprep.subr.mxu0 0.0
    %669 = vmatpush1.msra.mxu0 %v341
    %670 = vmatprep.subr.mxu0 0.0
    %671 = vmatpush1.msra.mxu0 %v344
    %672 = vmatprep.subr.mxu0 0.0
    %673 = vmatpush1.msra.mxu0 %v347
    %674 = vmatprep.subr.mxu0 0.0
    %675 = vmatpush1.msra.mxu0 %v350
    %676 = vmatprep.subr.mxu0 0.0
    %677 = vmatpush1.msra.mxu0 %v353
    %678 = vmatprep.subr.mxu0 0.0
    %679 = vmatpush1.msra.mxu0 %v356
    %680 = vmatprep.subr.mxu0 0.0
    %681 = vmatpush1.msra.mxu0 %v359
    %682 = vmatprep.subr.mxu0 0.0
    %683 = vmatpush1.msra.mxu0 %v362
    %684 = vmatprep.subr.mxu0 0.0
    %685 = vmatpush1.msra.mxu0 %v365
    %686 = vmatprep.subr.mxu0 0.0
    %687 = vmatpush1.msra.mxu0 %v368
    %688 = vmatprep.mubr.f32.mxu0 %v270
    %689 = vmatmul.mubr.f32.gmra.mrb[0].mxu0 %v269
    %v690 = vpop.f32.mrb[0].mxu0
    %v691 = vadd.f32 %v478, %v690
    %v692 = vpop.f32.mrb[0].mxu0
    %693 = vdwg.mxu0
    %694 = vmatprep.subr.mxu0 0.0
    %695 = vmatpush1.msra.mxu0 %v371
    %696 = vmatprep.subr.mxu0 0.0
    %697 = vmatpush1.msra.mxu0 %v374
    %698 = vmatprep.subr.mxu0 0.0
    %699 = vmatpush1.msra.mxu0 %v377
    %700 = vmatprep.subr.mxu0 0.0
    %701 = vmatpush1.msra.mxu0 %v380
    %702 = vmatprep.subr.mxu0 0.0
    %703 = vmatpush1.msra.mxu0 %v383
    %704 = vmatprep.subr.mxu0 0.0
    %705 = vmatpush1.msra.mxu0 %v386
    %706 = vmatprep.subr.mxu0 0.0
    %707 = vmatpush1.msra.mxu0 %v389
    %708 = vmatprep.subr.mxu0 0.0
    %709 = vmatpush1.msra.mxu0 %v392
    %710 = vmatprep.subr.mxu0 0.0
    %711 = vmatpush1.msra.mxu0 %v395
    %712 = vmatprep.subr.mxu0 0.0
    %713 = vmatpush1.msra.mxu0 %v398
    %714 = vmatprep.subr.mxu0 0.0
    %715 = vmatpush1.msra.mxu0 %v401
    %716 = vmatprep.subr.mxu0 0.0
    %717 = vmatpush1.msra.mxu0 %v404
    %718 = vmatprep.subr.mxu0 0.0
    %719 = vmatpush1.msra.mxu0 %v407
    %720 = vmatprep.subr.mxu0 0.0
    %721 = vmatpush1.msra.mxu0 %v410
    %722 = vmatprep.subr.mxu0 0.0
    %723 = vmatpush1.msra.mxu0 %v413
    %724 = vmatprep.subr.mxu0 0.0
    %725 = vmatpush1.msra.mxu0 %v416
    %726 = vmatprep.subr.mxu0 0.0
    %727 = vmatpush1.msra.mxu0 %v419
    %728 = vmatprep.subr.mxu0 0.0
    %729 = vmatpush1.msra.mxu0 %v422
    %730 = vmatprep.subr.mxu0 0.0
    %731 = vmatpush1.msra.mxu0 %v425
    %732 = vmatprep.subr.mxu0 0.0
    %733 = vmatpush1.msra.mxu0 %v428
    %734 = vmatprep.subr.mxu0 0.0
    %735 = vmatpush1.msra.mxu0 %v431
    %736 = vmatprep.subr.mxu0 0.0
    %737 = vmatpush1.msra.mxu0 %v434
    %738 = vmatprep.subr.mxu0 0.0
    %739 = vmatpush1.msra.mxu0 %v437
    %740 = vmatprep.subr.mxu0 0.0
    %741 = vmatpush1.msra.mxu0 %v440
    %742 = vmatprep.subr.mxu0 0.0
    %743 = vmatpush1.msra.mxu0 %v443
    %744 = vmatprep.subr.mxu0 0.0
    %745 = vmatpush1.msra.mxu0 %v446
    %746 = vmatprep.subr.mxu0 0.0
    %747 = vmatpush1.msra.mxu0 %v449
    %748 = vmatprep.subr.mxu0 0.0
    %749 = vmatpush1.msra.mxu0 %v452
    %750 = vmatprep.subr.mxu0 0.0
    %751 = vmatpush1.msra.mxu0 %v455
    %752 = vmatprep.subr.mxu0 0.0
    %753 = vmatpush1.msra.mxu0 %v458
    %754 = vmatprep.subr.mxu0 0.0
    %755 = vmatpush1.msra.mxu0 %v461
    %756 = vmatprep.subr.mxu0 0.0
    %757 = vmatpush1.msra.mxu0 %v464
    %758 = vmatprep.mubr.f32.mxu0 %v272
    %759 = vmatmul.mubr.f32.gmra.mrb[0].mxu0 %v271
    %v760 = vpop.f32.mrb[0].mxu0
    %v761 = vadd.f32 %v691, %v760
    %v762 = vpop.f32.mrb[0].mxu0
    %763 = vdwg.mxu0
    %v764 = vmax.f32 %v620, 0.0
    %v765 = vmax.f32 %v622, 0.0
    %v766 = vmax.f32 %v761, 0.0
    %v767 = vld [vmem:[#allocation6] sm:$0xff]
    %v768 = vld [vmem:[#allocation6 + $0x8] sm:$0xff]
    %v769 = vld [vmem:[#allocation6 + $0x10] sm:$0xff]
    %v770 = vld [vmem:[#allocation6 + $0x18] sm:$0xff]
    %v771 = vld [vmem:[#allocation6 + $0x20] sm:$0xff]
    %v772 = vld [vmem:[#allocation6 + $0x28] sm:$0xff]
    %v773 = vld [vmem:[#allocation6 + $0x30] sm:$0xff]
    %v774 = vld [vmem:[#allocation6 + $0x38] sm:$0xff]
    %v775 = vld [vmem:[#allocation6 + $0x40] sm:$0xff]
    %v776 = vld [vmem:[#allocation6 + $0x48] sm:$0xff]
    %v777 = vld [vmem:[#allocation6 + $0x50] sm:$0xff]
    %v778 = vld [vmem:[#allocation6 + $0x58] sm:$0xff]
    %v779 = vld [vmem:[#allocation6 + $0x60] sm:$0xff]
    %v780 = vld [vmem:[#allocation6 + $0x68] sm:$0xff]
    %v781 = vld [vmem:[#allocation6 + $0x70] sm:$0xff]
    %v782 = vld [vmem:[#allocation6 + $0x78] sm:$0xff]
    %v783 = vld [vmem:[#allocation6 + $0x80] sm:$0xff]
    %v784 = vld [vmem:[#allocation6 + $0x88] sm:$0xff]
    %v785 = vld [vmem:[#allocation6 + $0x90] sm:$0xff]
    %v786 = vld [vmem:[#allocation6 + $0x98] sm:$0xff]
    %v787 = vld [vmem:[#allocation6 + $0xa0] sm:$0xff]
    %v788 = vld [vmem:[#allocation6 + $0xa8] sm:$0xff]
    %v789 = vld [vmem:[#allocation6 + $0xb0] sm:$0xff]
    %v790 = vld [vmem:[#allocation6 + $0xb8] sm:$0xff]
    %v791 = vld [vmem:[#allocation6 + $0xc0] sm:$0xff]
    %v792 = vld [vmem:[#allocation6 + $0xc8] sm:$0xff]
    %v793 = vld [vmem:[#allocation6 + $0xd0] sm:$0xff]
    %v794 = vld [vmem:[#allocation6 + $0xd8] sm:$0xff]
    %v795 = vld [vmem:[#allocation6 + $0xe0] sm:$0xff]
    %v796 = vld [vmem:[#allocation6 + $0xe8] sm:$0xff]
    %v797 = vld [vmem:[#allocation6 + $0xf0] sm:$0xff]
    %v798 = vld [vmem:[#allocation6 + $0xf8] sm:$0xff]
    %v799 = vld [vmem:[#allocation6 + $0x100] sm:$0xff]
    %v800 = vld [vmem:[#allocation6 + $0x108] sm:$0xff]
    %v801 = vld [vmem:[#allocation6 + $0x110] sm:$0xff]
    %v802 = vld [vmem:[#allocation6 + $0x118] sm:$0xff]
    %v803 = vld [vmem:[#allocation6 + $0x120] sm:$0xff]
    %v804 = vld [vmem:[#allocation6 + $0x128] sm:$0xff]
    %v805 = vld [vmem:[#allocation6 + $0x130] sm:$0xff]
    %v806 = vld [vmem:[#allocation6 + $0x138] sm:$0xff]
    %v807 = vld [vmem:[#allocation6 + $0x140] sm:$0xff]
    %v808 = vld [vmem:[#allocation6 + $0x148] sm:$0xff]
    %v809 = vld [vmem:[#allocation6 + $0x150] sm:$0xff]
    %v810 = vld [vmem:[#allocation6 + $0x158] sm:$0xff]
    %v811 = vld [vmem:[#allocation6 + $0x160] sm:$0xff]
    %v812 = vld [vmem:[#allocation6 + $0x168] sm:$0xff]
    %v813 = vld [vmem:[#allocation6 + $0x170] sm:$0xff]
    %v814 = vld [vmem:[#allocation6 + $0x178] sm:$0xff]
    %v815 = vld [vmem:[%s6] sm:$0x1]
    %v817 = vlaneseq
    %v818 = vshrl.u32 %v817, 7
    %v819 = vsub.s32 0, %v818
    %v820 = vrot.slane %v815, %v819
    %822 = vmatprep.subr.mxu0 0.0
    %823 = vmatpush1.msra.mxu0 %v767
    %824 = vmatprep.subr.mxu0 0.0
    %825 = vmatpush1.msra.mxu0 %v768
    %826 = vmatprep.subr.mxu0 0.0
    %827 = vmatpush1.msra.mxu0 %v769
    %828 = vmatprep.subr.mxu0 0.0
    %829 = vmatpush1.msra.mxu0 %v770
    %830 = vmatprep.subr.mxu0 0.0
    %831 = vmatpush1.msra.mxu0 %v771
    %832 = vmatprep.subr.mxu0 0.0
    %833 = vmatpush1.msra.mxu0 %v772
    %834 = vmatprep.subr.mxu0 0.0
    %835 = vmatpush1.msra.mxu0 %v773
    %836 = vmatprep.subr.mxu0 0.0
    %837 = vmatpush1.msra.mxu0 %v774
    %838 = vmatprep.subr.mxu0 0.0
    %839 = vmatpush1.msra.mxu0 %v775
    %840 = vmatprep.subr.mxu0 0.0
    %841 = vmatpush1.msra.mxu0 %v776
    %842 = vmatprep.subr.mxu0 0.0
    %843 = vmatpush1.msra.mxu0 %v777
    %844 = vmatprep.subr.mxu0 0.0
    %845 = vmatpush1.msra.mxu0 %v778
    %846 = vmatprep.subr.mxu0 0.0
    %847 = vmatpush1.msra.mxu0 %v779
    %848 = vmatprep.subr.mxu0 0.0
    %849 = vmatpush1.msra.mxu0 %v780
    %850 = vmatprep.subr.mxu0 0.0
    %851 = vmatpush1.msra.mxu0 %v781
    %852 = vmatprep.subr.mxu0 0.0
    %853 = vmatpush1.msra.mxu0 %v782
    %854 = vmatprep.subr.mxu0 0.0
    %855 = vmatpush1.msra.mxu0 %v783
    %856 = vmatprep.subr.mxu0 0.0
    %857 = vmatpush1.msra.mxu0 %v784
    %858 = vmatprep.subr.mxu0 0.0
    %859 = vmatpush1.msra.mxu0 %v785
    %860 = vmatprep.subr.mxu0 0.0
    %861 = vmatpush1.msra.mxu0 %v786
    %862 = vmatprep.subr.mxu0 0.0
    %863 = vmatpush1.msra.mxu0 %v787
    %864 = vmatprep.subr.mxu0 0.0
    %865 = vmatpush1.msra.mxu0 %v788
    %866 = vmatprep.subr.mxu0 0.0
    %867 = vmatpush1.msra.mxu0 %v789
    %868 = vmatprep.subr.mxu0 0.0
    %869 = vmatpush1.msra.mxu0 %v790
    %870 = vmatprep.subr.mxu0 0.0
    %871 = vmatpush1.msra.mxu0 %v791
    %872 = vmatprep.subr.mxu0 0.0
    %873 = vmatpush1.msra.mxu0 %v792
    %874 = vmatprep.subr.mxu0 0.0
    %875 = vmatpush1.msra.mxu0 %v793
    %876 = vmatprep.subr.mxu0 0.0
    %877 = vmatpush1.msra.mxu0 %v794
    %878 = vmatprep.subr.mxu0 0.0
    %879 = vmatpush1.msra.mxu0 %v795
    %880 = vmatprep.subr.mxu0 0.0
    %881 = vmatpush1.msra.mxu0 %v796
    %882 = vmatprep.subr.mxu0 0.0
    %883 = vmatpush1.msra.mxu0 %v797
    %884 = vmatprep.subr.mxu0 0.0
    %885 = vmatpush1.msra.mxu0 %v798
    %886 = vmatprep.mubr.f32.mxu0 %v765
    %887 = vmatmul.mubr.f32.gmra.mrb[0].mxu0 %v764
    %v888 = vpop.f32.mrb[0].mxu0
    %v889 = vadd.f32 %v820, %v888
    %v890 = vpop.f32.mrb[0].mxu0
    %891 = vdwg.mxu0
    %892 = vmatprep.subr.mxu0 0.0
    %893 = vmatpush1.msra.mxu0 %v799
    %894 = vmatprep.subr.mxu0 0.0
    %895 = vmatpush1.msra.mxu0 %v800
    %896 = vmatprep.subr.mxu0 0.0
    %897 = vmatpush1.msra.mxu0 %v801
    %898 = vmatprep.subr.mxu0 0.0
    %899 = vmatpush1.msra.mxu0 %v802
    %900 = vmatprep.subr.mxu0 0.0
    %901 = vmatpush1.msra.mxu0 %v803
    %902 = vmatprep.subr.mxu0 0.0
    %903 = vmatpush1.msra.mxu0 %v804
    %904 = vmatprep.subr.mxu0 0.0
    %905 = vmatpush1.msra.mxu0 %v805
    %906 = vmatprep.subr.mxu0 0.0
    %907 = vmatpush1.msra.mxu0 %v806
    %908 = vmatprep.subr.mxu0 0.0
    %909 = vmatpush1.msra.mxu0 %v807
    %910 = vmatprep.subr.mxu0 0.0
    %911 = vmatpush1.msra.mxu0 %v808
    %912 = vmatprep.subr.mxu0 0.0
    %913 = vmatpush1.msra.mxu0 %v809
    %914 = vmatprep.subr.mxu0 0.0
    %915 = vmatpush1.msra.mxu0 %v810
    %916 = vmatprep.subr.mxu0 0.0
    %917 = vmatpush1.msra.mxu0 %v811
    %918 = vmatprep.subr.mxu0 0.0
    %919 = vmatpush1.msra.mxu0 %v812
    %920 = vmatprep.subr.mxu0 0.0
    %921 = vmatpush1.msra.mxu0 %v813
    %922 = vmatprep.subr.mxu0 0.0
    %923 = vmatpush1.msra.mxu0 %v814
    %924 = vmatprep.subr.mxu0 0.0
    %925 = vmatpush1.msra.mxu0 0.0
    %926 = vmatprep.subr.mxu0 0.0
    %927 = vmatpush1.msra.mxu0 0.0
    %928 = vmatprep.subr.mxu0 0.0
    %929 = vmatpush1.msra.mxu0 0.0
    %930 = vmatprep.subr.mxu0 0.0
    %931 = vmatpush1.msra.mxu0 0.0
    %932 = vmatprep.subr.mxu0 0.0
    %933 = vmatpush1.msra.mxu0 0.0
    %934 = vmatprep.subr.mxu0 0.0
    %935 = vmatpush1.msra.mxu0 0.0
    %936 = vmatprep.subr.mxu0 0.0
    %937 = vmatpush1.msra.mxu0 0.0
    %938 = vmatprep.subr.mxu0 0.0
    %939 = vmatpush1.msra.mxu0 0.0
    %940 = vmatprep.subr.mxu0 0.0
    %941 = vmatpush1.msra.mxu0 0.0
    %942 = vmatprep.subr.mxu0 0.0
    %943 = vmatpush1.msra.mxu0 0.0
    %944 = vmatprep.subr.mxu0 0.0
    %945 = vmatpush1.msra.mxu0 0.0
    %946 = vmatprep.subr.mxu0 0.0
    %947 = vmatpush1.msra.mxu0 0.0
    %948 = vmatprep.subr.mxu0 0.0
    %949 = vmatpush1.msra.mxu0 0.0
    %950 = vmatprep.subr.mxu0 0.0
    %951 = vmatpush1.msra.mxu0 0.0
    %952 = vmatprep.subr.mxu0 0.0
    %953 = vmatpush1.msra.mxu0 0.0
    %954 = vmatprep.subr.mxu0 0.0
    %955 = vmatpush1.msra.mxu0 0.0
    %956 = vmatprep.mubr.f32.mxu0 0.0
    %957 = vmatmul.mubr.f32.gmra.mrb[0].mxu0 %v766
    %v958 = vpop.f32.mrb[0].mxu0
    %v959 = vadd.f32 %v889, %v958
    %v960 = vpop.f32.mrb[0].mxu0
    %961 = vdwg.mxu0
    %962 = vmax.xlane.f32.xlu0 %v959
    %v963 = vpop.xlane.xlu0 %962
    %v964 = vsub.f32 %v959, %v963
    %v965 = vmul.f32 %v964, 1.442695
    %v966 = vpow.pop %v965
    %v967 = vld [vmem:[#allocation7] sm:$0xff]
    %v968 = vld [vmem:[#allocation7 + $0x8] sm:$0xff]
    %v969 = vld [vmem:[#allocation7 + $0x10] sm:$0xff]
    %v970 = vld [vmem:[#allocation7 + $0x18] sm:$0xff]
    %v971 = vld [vmem:[#allocation7 + $0x20] sm:$0xff]
    %v972 = vld [vmem:[#allocation7 + $0x28] sm:$0xff]
    %v973 = vld [vmem:[#allocation7 + $0x30] sm:$0xff]
    %v974 = vld [vmem:[#allocation7 + $0x38] sm:$0xff]
    %v975 = vld [vmem:[#allocation7 + $0x40] sm:$0xff]
    %v976 = vld [vmem:[#allocation7 + $0x48] sm:$0xff]
    %v977 = vld [vmem:[#allocation7 + $0x50] sm:$0xff]
    %v978 = vld [vmem:[#allocation7 + $0x58] sm:$0xff]
    %v979 = vld [vmem:[#allocation7 + $0x60] sm:$0xff]
    %v980 = vld [vmem:[#allocation7 + $0x68] sm:$0xff]
    %v981 = vld [vmem:[#allocation7 + $0x70] sm:$0xff]
    %v982 = vld [vmem:[#allocation7 + $0x78] sm:$0xff]
    %983 = vmatprep.subr.mxu0 0.0
    %984 = vmatpush1.msra.mxu0 %v967
    %985 = vmatprep.subr.mxu0 0.0
    %986 = vmatpush1.msra.mxu0 %v968
    %987 = vmatprep.subr.mxu0 0.0
    %988 = vmatpush1.msra.mxu0 %v969
    %989 = vmatprep.subr.mxu0 0.0
    %990 = vmatpush1.msra.mxu0 %v970
    %991 = vmatprep.subr.mxu0 0.0
    %992 = vmatpush1.msra.mxu0 %v971
    %993 = vmatprep.subr.mxu0 0.0
    %994 = vmatpush1.msra.mxu0 %v972
    %995 = vmatprep.subr.mxu0 0.0
    %996 = vmatpush1.msra.mxu0 %v973
    %997 = vmatprep.subr.mxu0 0.0
    %998 = vmatpush1.msra.mxu0 %v974
    %999 = vmatprep.subr.mxu0 0.0
    %1000 = vmatpush1.msra.mxu0 %v975
    %1001 = vmatprep.subr.mxu0 0.0
    %1002 = vmatpush1.msra.mxu0 %v976
    %1003 = vmatprep.subr.mxu0 0.0
    %1004 = vmatpush1.msra.mxu0 %v977
    %1005 = vmatprep.subr.mxu0 0.0
    %1006 = vmatpush1.msra.mxu0 %v978
    %1007 = vmatprep.subr.mxu0 0.0
    %1008 = vmatpush1.msra.mxu0 %v979
    %1009 = vmatprep.subr.mxu0 0.0
    %1010 = vmatpush1.msra.mxu0 %v980
    %1011 = vmatprep.subr.mxu0 0.0
    %1012 = vmatpush1.msra.mxu0 %v981
    %1013 = vmatprep.subr.mxu0 0.0
    %1014 = vmatpush1.msra.mxu0 %v982
    %1015 = vmatprep.subr.mxu0 0.0
    %1016 = vmatpush1.msra.mxu0 0.0
    %1017 = vmatprep.subr.mxu0 0.0
    %1018 = vmatpush1.msra.mxu0 0.0
    %1019 = vmatprep.subr.mxu0 0.0
    %1020 = vmatpush1.msra.mxu0 0.0
    %1021 = vmatprep.subr.mxu0 0.0
    %1022 = vmatpush1.msra.mxu0 0.0
    %1023 = vmatprep.subr.mxu0 0.0
    %1024 = vmatpush1.msra.mxu0 0.0
    %1025 = vmatprep.subr.mxu0 0.0
    %1026 = vmatpush1.msra.mxu0 0.0
    %1027 = vmatprep.subr.mxu0 0.0
    %1028 = vmatpush1.msra.mxu0 0.0
    %1029 = vmatprep.subr.mxu0 0.0
    %1030 = vmatpush1.msra.mxu0 0.0
    %1031 = vmatprep.subr.mxu0 0.0
    %1032 = vmatpush1.msra.mxu0 0.0
    %1033 = vmatprep.subr.mxu0 0.0
    %1034 = vmatpush1.msra.mxu0 0.0
    %1035 = vmatprep.subr.mxu0 0.0
    %1036 = vmatpush1.msra.mxu0 0.0
    %1037 = vmatprep.subr.mxu0 0.0
    %1038 = vmatpush1.msra.mxu0 0.0
    %1039 = vmatprep.subr.mxu0 0.0
    %1040 = vmatpush1.msra.mxu0 0.0
    %1041 = vmatprep.subr.mxu0 0.0
    %1042 = vmatpush1.msra.mxu0 0.0
    %1043 = vmatprep.subr.mxu0 0.0
    %1044 = vmatpush1.msra.mxu0 0.0
    %1045 = vmatprep.subr.mxu0 0.0
    %1046 = vmatpush1.msra.mxu0 0.0
    %1047 = vmatprep.mubr.f32.mxu0 0.0
    %1048 = vmatmul.mubr.f32.gmra.mrb[0].mxu0 %v966
    %v1049 = vpop.f32.mrb[0].mxu0
    %v1050 = vadd.f32 0.0, %v1049
    %v1051 = vpop.f32.mrb[0].mxu0
    %1052 = vdwg.mxu0
    %v1053 = vrcp.pop %v1050
    %v1054 = vmul.f32 %v966, %v1053
    %1055 = vst [vmem:[%s8] sm:$0xff] %v1054
    // Predicated region
    $region50: #{forward.1} parent=1 // pred_check
      _
    $region51: #{forward.1} parent=1 // pred_check_branch
      %1057 = sbr.rel (0) target = $region53
    $region52: #{forward.1} parent=1 // pred_region
      _
    $region53: #{forward.1} parent=1 // pred_fallthru
      _
    // Predicated region
    $region54: #{forward.1} parent=1 // pred_check
      _
    $region55: #{forward.1} parent=1 // pred_check_branch
      %1059 = sbr.rel (0) target = $region57
    $region56: #{forward.1} parent=1 // pred_region
      _
    $region57: #{forward.1} parent=1 // pred_fallthru
      _
    %1060 = vsyncpa [#allocation3], 1
    %1061 = vsyncpa [#allocation5], 1
    %1062 = vsyncpa [#allocation8], 1

</llo_original>
